<compile_context>
chip_gen: v7x
topology: tpu7x:2x2x1
jax: 0.10.0
libtpu: 0.0.40
codegen_flags: <defaults>
</compile_context>

<pallas_src>
import functools

import jax
import jax.numpy as jnp
from jax.experimental import pallas as pl
from jax.experimental.pallas import tpu as pltpu


_FOLD = 8  # samples folded onto the lane axis per reshaped row (row-major bitcast)


def _mlp_kernel(x_ref, w1_ref, b1_ref, w2_ref, b2_ref, o_ref):
    """Fused Linear(2,H) -> ReLU -> Linear(H,D) on 8-sample-folded rows.

    x_ref  : (bn8, 16)      8 samples per row   (lane-dense input tile)
    w1_ref : (16, 8H)       kron(I_8, W1^T)     (block-diagonal)
    b1_ref : (1, 8H)        tile(b1, 8)
    w2_ref : (8H, 8D)       kron(I_8, W2^T)     (block-diagonal)
    b2_ref : (1, 8D)        tile(b2, 8)
    o_ref  : (bn8, 8D)      8 embeddings per row (lane-dense output tile)
    """
    h = jnp.dot(x_ref[...], w1_ref[...], preferred_element_type=jnp.float32)
    h = jnp.maximum(h + b1_ref[...], 0.0)                       # bias + ReLU (VPU)
    o = jnp.dot(h, w2_ref[...], preferred_element_type=jnp.float32)
    o_ref[...] = o + b2_ref[...]


def _round_up(x, m):
    return ((x + m - 1) // m) * m


def _pick_block_rows(n, max_block=32768, align=512):
    """Tile size in samples: multiple of `align`, <= max_block, and an even
    number (>=2) of grid programs whenever there is enough work, so both v7x
    TensorCores get balanced work (harmless on single-TC v5e/v6e)."""
    n_al = _round_up(max(n, 1), align)
    num_progs = max(1, -(-n_al // max_block))
    if n_al > align:
        num_progs = max(2, num_progs)
        if num_progs % 2:
            num_progs += 1
    block = _round_up(-(-n_al // num_progs), align)
    return min(block, max_block)


@functools.partial(jax.jit, static_argnames=("block_rows", "min_pallas_rows"))
def spatial_encoder_forward(state, w1, b1, w2, b2, block_rows=None,
                            min_pallas_rows=0):
    """state: (..., 2) -> (..., head_dim), float32.

    Weights in the native PyTorch nn.Linear layout:
      w1 (H, 2), b1 (H,), w2 (D, H), b2 (D,).
    `min_pallas_rows`: below this many samples the plain-XLA path is used (the
    Pallas path only pays off for N in the thousands); default 0 so the kernel
    is always exercised in this script.
    """
    head_dim, hidden_dim = w2.shape
    lead = state.shape[:-1]

    x = state.reshape(-1, 2).astype(jnp.float32)
    n = x.shape[0]

    if n < min_pallas_rows:
        h = jnp.maximum(x @ w1.T + b1, 0.0)
        return (h @ w2.T + b2).reshape(lead + (head_dim,))

    # ---- tiling ----
    if block_rows is None:
        block_rows = _pick_block_rows(n)
    # Validate: must be a multiple of 8*_FOLD so the folded tile has >=8-aligned
    # sublanes (fixes the "non-multiple static block_n" correctness concern).
    block_rows = max(_FOLD * 8, _round_up(int(block_rows), _FOLD * 8))
    n_pad = _round_up(n, block_rows)
    if n_pad != n:
        x = jnp.pad(x, ((0, n_pad - n), (0, 0)))   # cheap: only 8 B/row of input

    # Fold 8 samples onto lanes: pure row-major reshapes, no transposes/copies.
    x8 = x.reshape(n_pad // _FOLD, _FOLD * 2)                       # (N/8, 16)

    # Block-diagonal weights: both layers become single lane-dense MXU matmuls.
    eye = jnp.eye(_FOLD, dtype=jnp.float32)
    w1_blk = jnp.kron(eye, w1.T.astype(jnp.float32))                # (16,  8H)
    w2_blk = jnp.kron(eye, w2.T.astype(jnp.float32))                # (8H,  8D)
    b1_blk = jnp.tile(b1.astype(jnp.float32), _FOLD)[None, :]       # (1,   8H)
    b2_blk = jnp.tile(b2.astype(jnp.float32), _FOLD)[None, :]       # (1,   8D)

    bn8 = block_rows // _FOLD
    grid = (n_pad // block_rows,)

    out8 = pl.pallas_call(
        _mlp_kernel,
        out_shape=jax.ShapeDtypeStruct((n_pad // _FOLD, _FOLD * head_dim),
                                       jnp.float32),
        grid_spec=pltpu.PrefetchScalarGridSpec(
            num_scalar_prefetch=0,
            grid=grid,
            in_specs=[
                pl.BlockSpec((bn8, _FOLD * 2), lambda i: (i, 0)),              # x tile
                pl.BlockSpec((_FOLD * 2, _FOLD * hidden_dim), lambda i: (0, 0)),
                pl.BlockSpec((1, _FOLD * hidden_dim), lambda i: (0, 0)),
                pl.BlockSpec((_FOLD * hidden_dim, _FOLD * head_dim), lambda i: (0, 0)),
                pl.BlockSpec((1, _FOLD * head_dim), lambda i: (0, 0)),
            ],
            out_specs=pl.BlockSpec((bn8, _FOLD * head_dim), lambda i: (i, 0)),
        ),
        compiler_params=pltpu.CompilerParams(
            dimension_semantics=("parallel",),
        ),
    )(x8, w1_blk, b1_blk, w2_blk, b2_blk)

    # Free row-major un-fold; padded garbage rows (if any) are sliced off.
    out = out8.reshape(n_pad, head_dim)[:n]
    return out.reshape(lead + (head_dim,))


def init_params(key, hidden_dim, head_dim):
    """PyTorch-style init, PyTorch nn.Linear layout (out_features, in_features)."""
    k1, k2, k3, k4 = jax.random.split(key, 4)
    bound1 = 1.0 / jnp.sqrt(2.0)
    bound2 = 1.0 / jnp.sqrt(float(hidden_dim))
    w1 = jax.random.uniform(k1, (hidden_dim, 2), jnp.float32, -bound1, bound1)
    b1 = jax.random.uniform(k2, (hidden_dim,), jnp.float32, -bound1, bound1)
    w2 = jax.random.uniform(k3, (head_dim, hidden_dim), jnp.float32, -bound2, bound2)
    b2 = jax.random.uniform(k4, (head_dim,), jnp.float32, -bound2, bound2)
    return w1, b1, w2, b2


def reference_forward(state, w1, b1, w2, b2):
    h = jnp.maximum(state @ w1.T + b1, 0.0)
    return h @ w2.T + b2


if __name__ == "__main__":
    hidden_dim = 32
    head_dim = 16

    key = jax.random.PRNGKey(0)
    k_params, k_s1, k_s2, k_s3 = jax.random.split(key, 4)
    w1, b1, w2, b2 = init_params(k_params, hidden_dim, head_dim)

    # Sampled 2-D locations, shape (num_samples, batch, 2), like the SGAN sampler.
    tests = (
        jax.random.normal(k_s1, (24, 2, 2), jnp.float32),    # N=48    1 program, padded tail
        jax.random.normal(k_s2, (24, 16, 2), jnp.float32),   # N=384   1 program, padded tail
        jax.random.normal(k_s3, (64, 96, 2), jnp.float32),   # N=6144  2 programs, no padding
    )

    for state in tests:
        out = jax.block_until_ready(
            spatial_encoder_forward(state, w1, b1, w2, b2))
        ref = reference_forward(state, w1, b1, w2, b2)
        assert out.shape == state.shape[:-1] + (head_dim,), out.shape
        assert jnp.allclose(out, ref, atol=1e-5, rtol=1e-5), "mismatch vs reference"

    print("KERNEL_OK")
</pallas_src>

<mosaic_0001>
module attributes {stable_mosaic.version = 11 : i64} {
  func.func @_mlp_kernel(%arg0: i32, %arg1: memref<64x16xf32, #tpu.memory_space<vmem>>, %arg2: memref<16x256xf32, #tpu.memory_space<vmem>>, %arg3: memref<1x256xf32, #tpu.memory_space<vmem>>, %arg4: memref<256x128xf32, #tpu.memory_space<vmem>>, %arg5: memref<1x128xf32, #tpu.memory_space<vmem>>, %arg6: memref<64x128xf32, #tpu.memory_space<vmem>>) attributes {dimension_semantics = [#tpu.dimension_semantics<parallel>], iteration_bounds = array<i64: 1>, scalar_prefetch = 0 : i64, scratch_operands = 0 : i64, tpu.core_type = #tpu.core_type<tc>, window_params = [{transform_indices = @transform_0, window_bounds = array<i64: 64, 16>}, {pipeline_mode = #tpu.pipeline_mode<synchronous>, transform_indices = @transform_1, window_bounds = array<i64: 16, 256>}, {pipeline_mode = #tpu.pipeline_mode<synchronous>, transform_indices = @transform_2, window_bounds = array<i64: 1, 256>}, {pipeline_mode = #tpu.pipeline_mode<synchronous>, transform_indices = @transform_3, window_bounds = array<i64: 256, 128>}, {pipeline_mode = #tpu.pipeline_mode<synchronous>, transform_indices = @transform_4, window_bounds = array<i64: 1, 128>}, {transform_indices = @transform_5, window_bounds = array<i64: 64, 128>}]} {
    %c0 = arith.constant 0 : index
    %c0_0 = arith.constant 0 : index
    %0 = vector.load %arg1[%c0, %c0_0] : memref<64x16xf32, #tpu.memory_space<vmem>>, vector<64x16xf32>
    %c0_1 = arith.constant 0 : index
    %c0_2 = arith.constant 0 : index
    %1 = vector.load %arg2[%c0_1, %c0_2] : memref<16x256xf32, #tpu.memory_space<vmem>>, vector<16x256xf32>
    %cst = arith.constant dense<0.000000e+00> : vector<64x256xf32>
    %2 = tpu.matmul %0, %1, %cst {dimension_numbers = #tpu.dot_dimension_numbers<[1], [0], [0], [1], [0, 0, 1, 1], [], []>} : vector<64x16xf32>, vector<16x256xf32>, vector<64x256xf32> -> vector<64x256xf32>
    %c0_3 = arith.constant 0 : index
    %c0_4 = arith.constant 0 : index
    %3 = vector.load %arg3[%c0_3, %c0_4] : memref<1x256xf32, #tpu.memory_space<vmem>>, vector<1x256xf32>
    %4 = vector.broadcast %3 : vector<1x256xf32> to vector<64x256xf32>
    %5 = arith.addf %2, %4 : vector<64x256xf32>
    %cst_5 = arith.constant 0.000000e+00 : f32
    %6 = vector.broadcast %cst_5 : f32 to vector<64x256xf32>
    %7 = arith.maximumf %5, %6 : vector<64x256xf32>
    %c0_6 = arith.constant 0 : index
    %c0_7 = arith.constant 0 : index
    %8 = vector.load %arg4[%c0_6, %c0_7] : memref<256x128xf32, #tpu.memory_space<vmem>>, vector<256x128xf32>
    %cst_8 = arith.constant dense<0.000000e+00> : vector<64x128xf32>
    %9 = tpu.matmul %7, %8, %cst_8 {dimension_numbers = #tpu.dot_dimension_numbers<[1], [0], [0], [1], [0, 0, 1, 1], [], []>} : vector<64x256xf32>, vector<256x128xf32>, vector<64x128xf32> -> vector<64x128xf32>
    %c0_9 = arith.constant 0 : index
    %c0_10 = arith.constant 0 : index
    %10 = vector.load %arg5[%c0_9, %c0_10] : memref<1x128xf32, #tpu.memory_space<vmem>>, vector<1x128xf32>
    %11 = vector.broadcast %10 : vector<1x128xf32> to vector<64x128xf32>
    %12 = arith.addf %9, %11 : vector<64x128xf32>
    %c0_11 = arith.constant 0 : index
    %c0_12 = arith.constant 0 : index
    %13 = vector.load %arg6[%c0_11, %c0_12] : memref<64x128xf32, #tpu.memory_space<vmem>>, vector<64x128xf32>
    tpu.vector_store %arg6[%c0_11, %c0_12], %12 {strides = array<i32>} : memref<64x128xf32, #tpu.memory_space<vmem>>, vector<64x128xf32>,
    return
  }
  func.func @transform_0(%arg0: i32) -> (i32, i32) {
    %c0_i32 = arith.constant 0 : i32
    %c0_i32_0 = arith.constant 0 : i32
    return %arg0, %c0_i32 : i32, i32
  }
  func.func @transform_1(%arg0: i32) -> (i32, i32) {
    %c0_i32 = arith.constant 0 : i32
    %c0_i32_0 = arith.constant 0 : i32
    %c0_i32_1 = arith.constant 0 : i32
    return %c0_i32, %c0_i32_0 : i32, i32
  }
  func.func @transform_2(%arg0: i32) -> (i32, i32) {
    %c0_i32 = arith.constant 0 : i32
    %c0_i32_0 = arith.constant 0 : i32
    %c0_i32_1 = arith.constant 0 : i32
    return %c0_i32, %c0_i32_0 : i32, i32
  }
  func.func @transform_3(%arg0: i32) -> (i32, i32) {
    %c0_i32 = arith.constant 0 : i32
    %c0_i32_0 = arith.constant 0 : i32
    %c0_i32_1 = arith.constant 0 : i32
    return %c0_i32, %c0_i32_0 : i32, i32
  }
  func.func @transform_4(%arg0: i32) -> (i32, i32) {
    %c0_i32 = arith.constant 0 : i32
    %c0_i32_0 = arith.constant 0 : i32
    %c0_i32_1 = arith.constant 0 : i32
    return %c0_i32, %c0_i32_0 : i32, i32
  }
  func.func @transform_5(%arg0: i32) -> (i32, i32) {
    %c0_i32 = arith.constant 0 : i32
    %c0_i32_0 = arith.constant 0 : i32
    return %arg0, %c0_i32 : i32, i32
  }
}

</mosaic_0001>

<llo_original>
// kernel: tile.13
$region0: #{tile.13}
  #allocation0 [shape = 's32[1]{0}', space=sflag, size = 0x4, scoped, tag = 'scoped memory for tile.13']
  %s0 = inlined_call_operand.vmem [shape: f32[32], index: 0, kind: input, shape index: {}]
  %s1 = inlined_call_operand.vmem [shape: f32[8,32], index: 1, kind: output, shape index: {}]
  // Predicated region
  $region2: #{tile.13} parent=0 // pred_check
    _
  $region3: #{tile.13} parent=0 // pred_check_branch
    %3 = sbr.rel (0) target = $region5
  $region4: #{tile.13} parent=0 // pred_region
    _
  $region5: #{tile.13} parent=0 // pred_fallthru
    _
  %v4 = vld [vmem:[%s0] ss:$0 sm:$0xff]
  %5 = vst [vmem:[%s1] sm:$0xff] %v4

// kernel: tile.14
$region0: #{tile.14}
  %s0 = inlined_call_operand.vmem [shape: f32[8,32], index: 0, kind: input, shape index: {}]
  %s1 = inlined_call_operand.vmem [shape: f32[1,256], index: 1, kind: output, shape index: {}]
  $region1: #{tile.14} parent=0
    #allocation0 [shape = 'u8[8192]{0}', space=vmem, size = 0x2000, scoped, tag = 'scoped mem for output reshape']
    %s2 = smov 3
    %v3 = vld [vmem:[%s0] ss:$4 sm:%s2]
    %vm4 = vcmask 261120
    %5 = vst.msk [vmem:[#allocation0] ss:$8 sm:$0x3] %vm4, %v3
    %s6 = scalar_lea.vmem %s0, 3
    %s7 = smov 3
    %v8 = vld [vmem:[%s6] ss:$4 sm:%s7]
    %9 = vrot.lane.b32.xlu0 %v8, 96
    %v10 = vpop.permute.xlu0 %9
    %vm11 = vcmask 1048320
    %12 = vst.msk [vmem:[#allocation0] ss:$8 sm:$0x3] %vm11, %v10
    %s13 = scalar_lea.vmem %s0, 2
    %s14 = smov 3
    %v15 = vld [vmem:[%s13] ss:$4 sm:%s14]
    %16 = vrot.lane.b32.xlu0 %v15, 64
    %v17 = vpop.permute.xlu0 %16
    %vm18 = vcmask 785920
    %19 = vst.msk [vmem:[#allocation0] ss:$8 sm:$0x3] %vm18, %v17
    %s20 = scalar_lea.vmem %s0, 1
    %s21 = smov 3
    %v22 = vld [vmem:[%s20] ss:$4 sm:%s21]
    %23 = vrot.lane.b32.xlu0 %v22, 32
    %v24 = vpop.permute.xlu0 %23
    %vm25 = vcmask 523520
    %26 = vst.msk [vmem:[#allocation0] ss:$8 sm:$0x3] %vm25, %v24
    %s28 = sshllo.u32 0, 1
    %v30 = vld [vmem:[#allocation0] sm:%s28]
    %s31 = sshllo.u32 0, 1
    %32 = vst [vmem:[%s1] sm:%s31] %v30
    %s33 = scalar_lea.vmem [#allocation0], 8
    %v34 = vld [vmem:[%s33] sm:%s28]
    %s35 = sshllo.u32 0, 1
    %s36 = scalar_lea.vmem %s1, 1
    %37 = vst [vmem:[%s36] sm:%s35] %v34

// kernel: tile.18
$region0: #{tile.18}
  #allocation0 [shape = 's32[1]{0}', space=sflag, size = 0x4, scoped, tag = 'scoped memory for tile.18']
  %s0 = inlined_call_operand.vmem [shape: f32[16], index: 0, kind: input, shape index: {}]
  %s1 = inlined_call_operand.vmem [shape: f32[8,16], index: 1, kind: output, shape index: {}]
  // Predicated region
  $region2: #{tile.18} parent=0 // pred_check
    _
  $region3: #{tile.18} parent=0 // pred_check_branch
    %3 = sbr.rel (0) target = $region5
  $region4: #{tile.18} parent=0 // pred_region
    _
  $region5: #{tile.18} parent=0 // pred_fallthru
    _
  %v4 = vld [vmem:[%s0] ss:$0 sm:$0xff]
  %5 = vst [vmem:[%s1] sm:$0xff] %v4

// kernel: tile.19
$region0: #{tile.19}
  %s0 = inlined_call_operand.vmem [shape: f32[8,16], index: 0, kind: input, shape index: {}]
  %s1 = inlined_call_operand.vmem [shape: f32[1,128], index: 1, kind: output, shape index: {}]
  $region1: #{tile.19} parent=0
    #allocation0 [shape = 'u8[4096]{0}', space=vmem, size = 0x1000, scoped, tag = 'scoped mem for output reshape']
    %v2 = vld [vmem:[%s0] sm:$0x1]
    %vm3 = vcmask 130048
    %4 = vst.msk [vmem:[#allocation0] sm:$0x1] %vm3, %v2
    %s5 = scalar_lea.vmem %s0, 7
    %v6 = vld [vmem:[%s5] sm:$0x1]
    %7 = vrot.lane.b32.xlu0 %v6, 112
    %v8 = vpop.permute.xlu0 %7
    %vm9 = vcmask 1048448
    %10 = vst.msk [vmem:[#allocation0] sm:$0x1] %vm9, %v8
    %s11 = scalar_lea.vmem %s0, 6
    %v12 = vld [vmem:[%s11] sm:$0x1]
    %13 = vrot.lane.b32.xlu0 %v12, 96
    %v14 = vpop.permute.xlu0 %13
    %vm15 = vcmask 917248
    %16 = vst.msk [vmem:[#allocation0] sm:$0x1] %vm15, %v14
    %s17 = scalar_lea.vmem %s0, 5
    %v18 = vld [vmem:[%s17] sm:$0x1]
    %19 = vrot.lane.b32.xlu0 %v18, 80
    %v20 = vpop.permute.xlu0 %19
    %vm21 = vcmask 786048
    %22 = vst.msk [vmem:[#allocation0] sm:$0x1] %vm21, %v20
    %s23 = scalar_lea.vmem %s0, 4
    %v24 = vld [vmem:[%s23] sm:$0x1]
    %25 = vrot.lane.b32.xlu0 %v24, 64
    %v26 = vpop.permute.xlu0 %25
    %vm27 = vcmask 654848
    %28 = vst.msk [vmem:[#allocation0] sm:$0x1] %vm27, %v26
    %s29 = scalar_lea.vmem %s0, 3
    %v30 = vld [vmem:[%s29] sm:$0x1]
    %31 = vrot.lane.b32.xlu0 %v30, 48
    %v32 = vpop.permute.xlu0 %31
    %vm33 = vcmask 523648
    %34 = vst.msk [vmem:[#allocation0] sm:$0x1] %vm33, %v32
    %s35 = scalar_lea.vmem %s0, 2
    %v36 = vld [vmem:[%s35] sm:$0x1]
    %37 = vrot.lane.b32.xlu0 %v36, 32
    %v38 = vpop.permute.xlu0 %37
    %vm39 = vcmask 392448
    %40 = vst.msk [vmem:[#allocation0] sm:$0x1] %vm39, %v38
    %s41 = scalar_lea.vmem %s0, 1
    %v42 = vld [vmem:[%s41] sm:$0x1]
    %43 = vrot.lane.b32.xlu0 %v42, 16
    %v44 = vpop.permute.xlu0 %43
    %vm45 = vcmask 261248
    %46 = vst.msk [vmem:[#allocation0] sm:$0x1] %vm45, %v44
    %s48 = sshllo.u32 0, 1
    %v50 = vld [vmem:[#allocation0] sm:%s48]
    %s51 = sshllo.u32 0, 1
    %52 = vst [vmem:[%s1] sm:%s51] %v50

// kernel: spatial_encoder_forward.1
$region0: #{spatial_encoder_forward.1}
  #allocation0 [shape = 'u32[]', space=smem, size = 0x4, offset = 0x4, fixed_abs, tag = 'smem constant byte address 0x4 - core index']
  #allocation1 [shape = 'u32[144,128]{1,0:T(1,128)}', space=vmem, size = 0x12000, scoped, tag = 'internal scratch']
  %s0 = inlined_call_operand.vmem [shape: f32[64,16], index: 0, kind: input, shape index: {}]
  %s1 = inlined_call_operand.vmem [shape: f32[16,256], index: 1, kind: input, shape index: {}]
  %s2 = inlined_call_operand.vmem [shape: f32[1,256], index: 2, kind: input, shape index: {}]
  %s3 = inlined_call_operand.vmem [shape: f32[256,128], index: 3, kind: input, shape index: {}]
  %s4 = inlined_call_operand.vmem [shape: f32[1,128], index: 4, kind: input, shape index: {}]
  %s5 = inlined_call_operand.vmem [shape: f32[64,128], index: 5, kind: output, shape index: {}]
  %s6 = sld [smem:[#allocation0]]
  $region30: #{spatial_encoder_forward.1} parent=0
    _
  %s8 = ssub.s32 1, %s6
  %s9 = scalar_select 0, %s8, %s6
  // Predicated region
  $region2: #{spatial_encoder_forward.1} parent=0 // pred_check
    _
  $region3: #{spatial_encoder_forward.1} parent=0 // pred_check_branch
    %11 = sbr.rel (0) target = $region5
  $region4: #{spatial_encoder_forward.1} parent=0 // pred_region
    _
  $region5: #{spatial_encoder_forward.1} parent=0 // pred_fallthru
    _
  // Predicated region
  $region6: #{spatial_encoder_forward.1} parent=0 // pred_check
    _
  $region7: #{spatial_encoder_forward.1} parent=0 // pred_check_branch
    %13 = sbr.rel (0) target = $region9
  $region8: #{spatial_encoder_forward.1} parent=0 // pred_region
    _
  $region9: #{spatial_encoder_forward.1} parent=0 // pred_fallthru
    _
  // Predicated region
  $region10: #{spatial_encoder_forward.1} parent=0 // pred_check
    _
  $region11: #{spatial_encoder_forward.1} parent=0 // pred_check_branch
    %15 = sbr.rel (0) target = $region13
  $region12: #{spatial_encoder_forward.1} parent=0 // pred_region
    _
  $region13: #{spatial_encoder_forward.1} parent=0 // pred_fallthru
    _
  // Predicated region
  $region14: #{spatial_encoder_forward.1} parent=0 // pred_check
    _
  $region15: #{spatial_encoder_forward.1} parent=0 // pred_check_branch
    %17 = sbr.rel (0) target = $region17
  $region16: #{spatial_encoder_forward.1} parent=0 // pred_region
    _
  $region17: #{spatial_encoder_forward.1} parent=0 // pred_fallthru
    _
  // Predicated region
  $region18: #{spatial_encoder_forward.1} parent=0 // pred_check
    _
  $region19: #{spatial_encoder_forward.1} parent=0 // pred_check_branch
    %19 = sbr.rel (0) target = $region21
  $region20: #{spatial_encoder_forward.1} parent=0 // pred_region
    _
  $region21: #{spatial_encoder_forward.1} parent=0 // pred_fallthru
    _
  %v20 = vld [vmem:[%s0] sm:$0xff]
  %v21 = vld [vmem:[%s0 + $0x8] sm:$0xff]
  %v22 = vld [vmem:[%s0 + $0x10] sm:$0xff]
  %v23 = vld [vmem:[%s0 + $0x18] sm:$0xff]
  %v24 = vld [vmem:[%s0 + $0x20] sm:$0xff]
  %v25 = vld [vmem:[%s0 + $0x28] sm:$0xff]
  %v26 = vld [vmem:[%s0 + $0x30] sm:$0xff]
  %v27 = vld [vmem:[%s0 + $0x38] sm:$0xff]
  %v28 = vld [vmem:[%s1] sm:$0xff]
  %v29 = vld [vmem:[%s1 + $0x8] sm:$0xff]
  %v30 = vld [vmem:[%s1 + $0x10] sm:$0xff]
  %v31 = vld [vmem:[%s1 + $0x18] sm:$0xff]
  %v32 = vld [vmem:[%s2] sm:$0x3]
  %v34 = vlaneseq
  %v35 = vshrl.u32 %v34, 7
  %v36 = vsub.s32 0, %v35
  %v37 = vrot.slane %v32, %v36
  %v38 = vlaneseq
  %v39 = vshrl.u32 %v38, 7
  %v40 = vsub.s32 1, %v39
  %v41 = vrot.slane %v32, %v40
  %vm44 = vcmask 130048
  %v46 = vsel %vm44, %v20, 0
  %v49 = vsel %vm44, %v21, 0
  %v52 = vsel %vm44, %v22, 0
  %v55 = vsel %vm44, %v23, 0
  %v58 = vsel %vm44, %v24, 0
  %v61 = vsel %vm44, %v25, 0
  %v64 = vsel %vm44, %v26, 0
  %v67 = vsel %vm44, %v27, 0
  %69 = vmatprep.subr.mxu0 %v29
  %70 = vmatpush1.msra.mxu0 %v28
  %71 = vmatprep.subr.mxu0 %v31
  %72 = vmatpush1.msra.mxu0 %v30
  %73 = vmatprep.subr.mxu0 0.0
  %74 = vmatpush1.msra.mxu0 0.0
  %75 = vmatprep.subr.mxu0 0.0
  %76 = vmatpush1.msra.mxu0 0.0
  %77 = vmatprep.subr.mxu0 0.0
  %78 = vmatpush1.msra.mxu0 0.0
  %79 = vmatprep.subr.mxu0 0.0
  %80 = vmatpush1.msra.mxu0 0.0
  %81 = vmatprep.subr.mxu0 0.0
  %82 = vmatpush1.msra.mxu0 0.0
  %83 = vmatprep.subr.mxu0 0.0
  %84 = vmatpush1.msra.mxu0 0.0
  %85 = vmatprep.subr.mxu0 0.0
  %86 = vmatpush1.msra.mxu0 0.0
  %87 = vmatprep.subr.mxu0 0.0
  %88 = vmatpush1.msra.mxu0 0.0
  %89 = vmatprep.subr.mxu0 0.0
  %90 = vmatpush1.msra.mxu0 0.0
  %91 = vmatprep.subr.mxu0 0.0
  %92 = vmatpush1.msra.mxu0 0.0
  %93 = vmatprep.subr.mxu0 0.0
  %94 = vmatpush1.msra.mxu0 0.0
  %95 = vmatprep.subr.mxu0 0.0
  %96 = vmatpush1.msra.mxu0 0.0
  %97 = vmatprep.subr.mxu0 0.0
  %98 = vmatpush1.msra.mxu0 0.0
  %99 = vmatprep.subr.mxu0 0.0
  %100 = vmatpush1.msra.mxu0 0.0
  %101 = vmatprep.subr.mxu0 0.0
  %102 = vmatpush1.msra.mxu0 0.0
  %103 = vmatprep.subr.mxu0 0.0
  %104 = vmatpush1.msra.mxu0 0.0
  %105 = vmatprep.subr.mxu0 0.0
  %106 = vmatpush1.msra.mxu0 0.0
  %107 = vmatprep.subr.mxu0 0.0
  %108 = vmatpush1.msra.mxu0 0.0
  %109 = vmatprep.subr.mxu0 0.0
  %110 = vmatpush1.msra.mxu0 0.0
  %111 = vmatprep.subr.mxu0 0.0
  %112 = vmatpush1.msra.mxu0 0.0
  %113 = vmatprep.subr.mxu0 0.0
  %114 = vmatpush1.msra.mxu0 0.0
  %115 = vmatprep.subr.mxu0 0.0
  %116 = vmatpush1.msra.mxu0 0.0
  %117 = vmatprep.subr.mxu0 0.0
  %118 = vmatpush1.msra.mxu0 0.0
  %119 = vmatprep.subr.mxu0 0.0
  %120 = vmatpush1.msra.mxu0 0.0
  %121 = vmatprep.subr.mxu0 0.0
  %122 = vmatpush1.msra.mxu0 0.0
  %123 = vmatprep.subr.mxu0 0.0
  %124 = vmatpush1.msra.mxu0 0.0
  %125 = vmatprep.subr.mxu0 0.0
  %126 = vmatpush1.msra.mxu0 0.0
  %127 = vmatprep.subr.mxu0 0.0
  %128 = vmatpush1.msra.mxu0 0.0
  %129 = vmatprep.subr.mxu0 0.0
  %130 = vmatpush1.msra.mxu0 0.0
  %131 = vmatprep.subr.mxu0 0.0
  %132 = vmatpush1.msra.mxu0 0.0
  %133 = vmatprep.mubr.f32.mxu0 0.0
  %134 = vmatmul.mubr.f32.gmra.mrb[0].mxu0 %v46
  %v135 = vpop.f32.mrb[0].mxu0
  %v136 = vadd.f32 %v37, %v135
  %v137 = vpop.f32.mrb[0].mxu0
  %v138 = vadd.f32 %v41, %v137
  %139 = vmatprep.mubr.f32.mxu0 0.0
  %140 = vmatmul.mubr.f32.gmra.mrb[0].mxu0 %v49
  %v141 = vpop.f32.mrb[0].mxu0
  %v142 = vadd.f32 %v37, %v141
  %v143 = vpop.f32.mrb[0].mxu0
  %v144 = vadd.f32 %v41, %v143
  %145 = vmatprep.mubr.f32.mxu0 0.0
  %146 = vmatmul.mubr.f32.gmra.mrb[0].mxu0 %v52
  %v147 = vpop.f32.mrb[0].mxu0
  %v148 = vadd.f32 %v37, %v147
  %v149 = vpop.f32.mrb[0].mxu0
  %v150 = vadd.f32 %v41, %v149
  %151 = vmatprep.mubr.f32.mxu0 0.0
  %152 = vmatmul.mubr.f32.gmra.mrb[0].mxu0 %v55
  %v153 = vpop.f32.mrb[0].mxu0
  %v154 = vadd.f32 %v37, %v153
  %v155 = vpop.f32.mrb[0].mxu0
  %v156 = vadd.f32 %v41, %v155
  %157 = vmatprep.mubr.f32.mxu0 0.0
  %158 = vmatmul.mubr.f32.gmra.mrb[0].mxu0 %v58
  %v159 = vpop.f32.mrb[0].mxu0
  %v160 = vadd.f32 %v37, %v159
  %v161 = vpop.f32.mrb[0].mxu0
  %v162 = vadd.f32 %v41, %v161
  %163 = vmatprep.mubr.f32.mxu0 0.0
  %164 = vmatmul.mubr.f32.gmra.mrb[0].mxu0 %v61
  %v165 = vpop.f32.mrb[0].mxu0
  %v166 = vadd.f32 %v37, %v165
  %v167 = vpop.f32.mrb[0].mxu0
  %v168 = vadd.f32 %v41, %v167
  %169 = vmatprep.mubr.f32.mxu0 0.0
  %170 = vmatmul.mubr.f32.gmra.mrb[0].mxu0 %v64
  %v171 = vpop.f32.mrb[0].mxu0
  %v172 = vadd.f32 %v37, %v171
  %v173 = vpop.f32.mrb[0].mxu0
  %v174 = vadd.f32 %v41, %v173
  %175 = vmatprep.mubr.f32.mxu0 0.0
  %176 = vmatmul.mubr.f32.gmra.mrb[0].mxu0 %v67
  %v177 = vpop.f32.mrb[0].mxu0
  %v178 = vadd.f32 %v37, %v177
  %v179 = vpop.f32.mrb[0].mxu0
  %v180 = vadd.f32 %v41, %v179
  %181 = vdwg.mxu0
  %v182 = vmax.f32 %v136, 0.0
  %v183 = vmax.f32 %v138, 0.0
  %v184 = vmax.f32 %v142, 0.0
  %v185 = vmax.f32 %v144, 0.0
  %v186 = vmax.f32 %v148, 0.0
  %v187 = vmax.f32 %v150, 0.0
  %v188 = vmax.f32 %v154, 0.0
  %v189 = vmax.f32 %v156, 0.0
  %v190 = vmax.f32 %v160, 0.0
  %v191 = vmax.f32 %v162, 0.0
  %v192 = vmax.f32 %v166, 0.0
  %v193 = vmax.f32 %v168, 0.0
  %v194 = vmax.f32 %v172, 0.0
  %v195 = vmax.f32 %v174, 0.0
  %v196 = vmax.f32 %v178, 0.0
  %v197 = vmax.f32 %v180, 0.0
  %v198 = vld [vmem:[%s3] sm:$0xff]
  %v199 = vld [vmem:[%s3 + $0x8] sm:$0xff]
  %v200 = vld [vmem:[%s3 + $0x10] sm:$0xff]
  %v201 = vld [vmem:[%s3 + $0x18] sm:$0xff]
  %v202 = vld [vmem:[%s3 + $0x20] sm:$0xff]
  %v203 = vld [vmem:[%s3 + $0x28] sm:$0xff]
  %v204 = vld [vmem:[%s3 + $0x30] sm:$0xff]
  %v205 = vld [vmem:[%s3 + $0x38] sm:$0xff]
  %v206 = vld [vmem:[%s3 + $0x40] sm:$0xff]
  %v207 = vld [vmem:[%s3 + $0x48] sm:$0xff]
  %v208 = vld [vmem:[%s3 + $0x50] sm:$0xff]
  %v209 = vld [vmem:[%s3 + $0x58] sm:$0xff]
  %v210 = vld [vmem:[%s3 + $0x60] sm:$0xff]
  %v211 = vld [vmem:[%s3 + $0x68] sm:$0xff]
  %v212 = vld [vmem:[%s3 + $0x70] sm:$0xff]
  %v213 = vld [vmem:[%s3 + $0x78] sm:$0xff]
  %v214 = vld [vmem:[%s3 + $0x80] sm:$0xff]
  %v215 = vld [vmem:[%s3 + $0x88] sm:$0xff]
  %v216 = vld [vmem:[%s3 + $0x90] sm:$0xff]
  %v217 = vld [vmem:[%s3 + $0x98] sm:$0xff]
  %v218 = vld [vmem:[%s3 + $0xa0] sm:$0xff]
  %v219 = vld [vmem:[%s3 + $0xa8] sm:$0xff]
  %v220 = vld [vmem:[%s3 + $0xb0] sm:$0xff]
  %v221 = vld [vmem:[%s3 + $0xb8] sm:$0xff]
  %v222 = vld [vmem:[%s3 + $0xc0] sm:$0xff]
  %v223 = vld [vmem:[%s3 + $0xc8] sm:$0xff]
  %v224 = vld [vmem:[%s3 + $0xd0] sm:$0xff]
  %v225 = vld [vmem:[%s3 + $0xd8] sm:$0xff]
  %v226 = vld [vmem:[%s3 + $0xe0] sm:$0xff]
  %v227 = vld [vmem:[%s3 + $0xe8] sm:$0xff]
  %v228 = vld [vmem:[%s3 + $0xf0] sm:$0xff]
  %v229 = vld [vmem:[%s3 + $0xf8] sm:$0xff]
  %v230 = vld [vmem:[%s4] sm:$0x1]
  %v232 = vlaneseq
  %v233 = vshrl.u32 %v232, 7
  %v234 = vsub.s32 0, %v233
  %v235 = vrot.slane %v230, %v234
  %237 = vmatprep.subr.mxu0 0.0
  %238 = vmatpush1.msra.mxu0 %v198
  %239 = vmatprep.subr.mxu0 0.0
  %240 = vmatpush1.msra.mxu0 %v199
  %241 = vmatprep.subr.mxu0 0.0
  %242 = vmatpush1.msra.mxu0 %v200
  %243 = vmatprep.subr.mxu0 0.0
  %244 = vmatpush1.msra.mxu0 %v201
  %245 = vmatprep.subr.mxu0 0.0
  %246 = vmatpush1.msra.mxu0 %v202
  %247 = vmatprep.subr.mxu0 0.0
  %248 = vmatpush1.msra.mxu0 %v203
  %249 = vmatprep.subr.mxu0 0.0
  %250 = vmatpush1.msra.mxu0 %v204
  %251 = vmatprep.subr.mxu0 0.0
  %252 = vmatpush1.msra.mxu0 %v205
  %253 = vmatprep.subr.mxu0 0.0
  %254 = vmatpush1.msra.mxu0 %v206
  %255 = vmatprep.subr.mxu0 0.0
  %256 = vmatpush1.msra.mxu0 %v207
  %257 = vmatprep.subr.mxu0 0.0
  %258 = vmatpush1.msra.mxu0 %v208
  %259 = vmatprep.subr.mxu0 0.0
  %260 = vmatpush1.msra.mxu0 %v209
  %261 = vmatprep.subr.mxu0 0.0
  %262 = vmatpush1.msra.mxu0 %v210
  %263 = vmatprep.subr.mxu0 0.0
  %264 = vmatpush1.msra.mxu0 %v211
  %265 = vmatprep.subr.mxu0 0.0
  %266 = vmatpush1.msra.mxu0 %v212
  %267 = vmatprep.subr.mxu0 0.0
  %268 = vmatpush1.msra.mxu0 %v213
  %269 = vmatprep.subr.mxu0 0.0
  %270 = vmatpush1.msra.mxu0 %v214
  %271 = vmatprep.subr.mxu0 0.0
  %272 = vmatpush1.msra.mxu0 %v215
  %273 = vmatprep.subr.mxu0 0.0
  %274 = vmatpush1.msra.mxu0 %v216
  %275 = vmatprep.subr.mxu0 0.0
  %276 = vmatpush1.msra.mxu0 %v217
  %277 = vmatprep.subr.mxu0 0.0
  %278 = vmatpush1.msra.mxu0 %v218
  %279 = vmatprep.subr.mxu0 0.0
  %280 = vmatpush1.msra.mxu0 %v219
  %281 = vmatprep.subr.mxu0 0.0
  %282 = vmatpush1.msra.mxu0 %v220
  %283 = vmatprep.subr.mxu0 0.0
  %284 = vmatpush1.msra.mxu0 %v221
  %285 = vmatprep.subr.mxu0 0.0
  %286 = vmatpush1.msra.mxu0 %v222
  %287 = vmatprep.subr.mxu0 0.0
  %288 = vmatpush1.msra.mxu0 %v223
  %289 = vmatprep.subr.mxu0 0.0
  %290 = vmatpush1.msra.mxu0 %v224
  %291 = vmatprep.subr.mxu0 0.0
  %292 = vmatpush1.msra.mxu0 %v225
  %293 = vmatprep.subr.mxu0 0.0
  %294 = vmatpush1.msra.mxu0 %v226
  %295 = vmatprep.subr.mxu0 0.0
  %296 = vmatpush1.msra.mxu0 %v227
  %297 = vmatprep.subr.mxu0 0.0
  %298 = vmatpush1.msra.mxu0 %v228
  %299 = vmatprep.subr.mxu0 0.0
  %300 = vmatpush1.msra.mxu0 %v229
  %301 = vmatprep.mubr.f32.mxu0 %v183
  %302 = vmatmul.mubr.f32.gmra.mrb[0].mxu0 %v182
  %v303 = vpop.f32.mrb[0].mxu0
  %v304 = vadd.f32 %v235, %v303
  %v305 = vpop.f32.mrb[0].mxu0
  %306 = vmatprep.mubr.f32.mxu0 %v185
  %307 = vmatmul.mubr.f32.gmra.mrb[0].mxu0 %v184
  %v308 = vpop.f32.mrb[0].mxu0
  %v309 = vadd.f32 %v235, %v308
  %v310 = vpop.f32.mrb[0].mxu0
  %311 = vmatprep.mubr.f32.mxu0 %v187
  %312 = vmatmul.mubr.f32.gmra.mrb[0].mxu0 %v186
  %v313 = vpop.f32.mrb[0].mxu0
  %v314 = vadd.f32 %v235, %v313
  %v315 = vpop.f32.mrb[0].mxu0
  %316 = vmatprep.mubr.f32.mxu0 %v189
  %317 = vmatmul.mubr.f32.gmra.mrb[0].mxu0 %v188
  %v318 = vpop.f32.mrb[0].mxu0
  %v319 = vadd.f32 %v235, %v318
  %v320 = vpop.f32.mrb[0].mxu0
  %321 = vmatprep.mubr.f32.mxu0 %v191
  %322 = vmatmul.mubr.f32.gmra.mrb[0].mxu0 %v190
  %v323 = vpop.f32.mrb[0].mxu0
  %v324 = vadd.f32 %v235, %v323
  %v325 = vpop.f32.mrb[0].mxu0
  %326 = vmatprep.mubr.f32.mxu0 %v193
  %327 = vmatmul.mubr.f32.gmra.mrb[0].mxu0 %v192
  %v328 = vpop.f32.mrb[0].mxu0
  %v329 = vadd.f32 %v235, %v328
  %v330 = vpop.f32.mrb[0].mxu0
  %331 = vmatprep.mubr.f32.mxu0 %v195
  %332 = vmatmul.mubr.f32.gmra.mrb[0].mxu0 %v194
  %v333 = vpop.f32.mrb[0].mxu0
  %v334 = vadd.f32 %v235, %v333
  %v335 = vpop.f32.mrb[0].mxu0
  %336 = vmatprep.mubr.f32.mxu0 %v197
  %337 = vmatmul.mubr.f32.gmra.mrb[0].mxu0 %v196
  %v338 = vpop.f32.mrb[0].mxu0
  %v339 = vadd.f32 %v235, %v338
  %v340 = vpop.f32.mrb[0].mxu0
  %341 = vdwg.mxu0
  %342 = vst [vmem:[%s5] sm:$0xff] %v304
  %343 = vst [vmem:[%s5 + $0x8] sm:$0xff] %v309
  %344 = vst [vmem:[%s5 + $0x10] sm:$0xff] %v314
  %345 = vst [vmem:[%s5 + $0x18] sm:$0xff] %v319
  %346 = vst [vmem:[%s5 + $0x20] sm:$0xff] %v324
  %347 = vst [vmem:[%s5 + $0x28] sm:$0xff] %v329
  %348 = vst [vmem:[%s5 + $0x30] sm:$0xff] %v334
  %349 = vst [vmem:[%s5 + $0x38] sm:$0xff] %v339
  // Predicated region
  $region22: #{spatial_encoder_forward.1} parent=0 // pred_check
    _
  $region23: #{spatial_encoder_forward.1} parent=0 // pred_check_branch
    %351 = sbr.rel (0) target = $region25
  $region24: #{spatial_encoder_forward.1} parent=0 // pred_region
    _
  $region25: #{spatial_encoder_forward.1} parent=0 // pred_fallthru
    _
  // Predicated region
  $region26: #{spatial_encoder_forward.1} parent=0 // pred_check
    _
  $region27: #{spatial_encoder_forward.1} parent=0 // pred_check_branch
    %353 = sbr.rel (0) target = $region29
  $region28: #{spatial_encoder_forward.1} parent=0 // pred_region
    _
  $region29: #{spatial_encoder_forward.1} parent=0 // pred_fallthru
    _

</llo_original>
